<compile_context>
chip_gen: v5e
topology: v5e:2x2
jax: 0.10.0
libtpu: 0.0.40
codegen_flags: <defaults>
</compile_context>

<pallas_src>
import functools

import jax
import jax.numpy as jnp
from jax.experimental import pallas as pl
from jax.experimental.pallas import tpu as pltpu

NEG_SLOPE = 0.2        # negative_slope of GATv2 scoring and of F.leaky_relu
BN_EPS = 1e-5
MASK_NEG = -1e30       # masked-score value (finite -> no inf/nan in online softmax)

_VMEM_LIMIT_CACHE = None


def _vmem_limit_bytes():
    """Scoped-VMEM budget: 3/4 of physical, capped at 96 MiB (v7x-safe fallback)."""
    global _VMEM_LIMIT_CACHE
    if _VMEM_LIMIT_CACHE is None:
        try:
            cap = int(pltpu.get_tpu_info().vmem_capacity_bytes)
        except Exception:
            cap = 64 * 1024 * 1024          # conservative: v7x physical VMEM
        _VMEM_LIMIT_CACHE = int(min(cap * 3 // 4, 96 * 1024 * 1024))
    return _VMEM_LIMIT_CACHE


def _score_dtype():
    """bf16 scoring only on chips whose VPU has bf16 (v6e / v7x); else f32."""
    try:
        kind = jax.devices()[0].device_kind.lower()
    except Exception:
        kind = ""
    if ("v6" in kind) or ("v7" in kind) or ("tpu7" in kind):
        return jnp.bfloat16
    return jnp.float32


def _pick_tile(n, cap, quantum):
    """Largest multiple of `quantum` <= cap that divides n (else full n)."""
    if n <= cap:
        return n
    t = (cap // quantum) * quantum
    while t >= quantum:
        if n % t == 0:
            return t
        t -= quantum
    # TODO(synk): pad N up to a tile multiple for ragged graph sizes instead of
    # falling back to full-N tiles.
    return n


def _tile_sizes(n):
    # tq: second-minor of bf16 slabs / int8 adj tiles -> quantum 32.
    # tk: lane dim of adj / score tiles -> quantum 128; cap 256 keeps the
    # compiler-materialized (TQ, TK, 128) score temporaries inside the scoped
    # VMEM budget even on 64-MiB-VMEM parts (v7x).
    tq = _pick_tile(n, 128, 32)
    tk = _pick_tile(n, 256, 128)
    return tq, tk


# ----------------------------- Pallas kernels ------------------------------

def _fused_proj_kernel(x_ref, w_ref, b_ref, o_ref):
    # x: (TQ, Din) -> bf16, w: (Din, Dout) bf16, b: (1, Dout) f32 -> o bf16
    x = x_ref[...].astype(jnp.bfloat16)
    acc = jnp.dot(x, w_ref[...], preferred_element_type=jnp.float32)
    o_ref[...] = (acc + b_ref[...]).astype(o_ref.dtype)


def fused_proj_pallas(x, w_bf16, b, *, tq):
    n, din = x.shape
    dout = w_bf16.shape[1]
    return pl.pallas_call(
        _fused_proj_kernel,
        out_shape=jax.ShapeDtypeStruct((n, dout), jnp.bfloat16),
        grid=(n // tq,),
        in_specs=[
            pl.BlockSpec((tq, din), lambda i: (i, 0)),
            pl.BlockSpec((din, dout), lambda i: (0, 0)),
            pl.BlockSpec((1, dout), lambda i: (0, 0)),
        ],
        out_specs=pl.BlockSpec((tq, dout), lambda i: (i, 0)),
        compiler_params=pltpu.CompilerParams(
            dimension_semantics=("parallel",),
            vmem_limit_bytes=_vmem_limit_bytes()),
    )(x, w_bf16, b.reshape(1, dout))


def _gat_layer_kernel(cnt_ref, xr_ref, xl_ref, att_ref, adj_ref, bias_ref,
                      scale_ref, shift_ref, *rest, n_heads, channels,
                      inv_heads, add_residual, score_dtype):
    """GATv2 layer: lane-dense scoring + online-softmax + fused epilogue."""
    if add_residual:
        res_ref, o_ref, m_sc, l_sc, acc_sc = rest
    else:
        res_ref = None
        o_ref, m_sc, l_sc, acc_sc = rest

    i = pl.program_id(0)
    k = pl.program_id(1)

    @pl.when(k == 0)
    def _init():
        m_sc[...] = jnp.full(m_sc.shape, MASK_NEG, dtype=jnp.float32)
        l_sc[...] = jnp.zeros(l_sc.shape, dtype=jnp.float32)
        acc_sc[...] = jnp.zeros(acc_sc.shape, dtype=jnp.float32)

    # Sparse tile skipping: whole body gated on the prefetched edge count.
    # TODO(synk): drive the k index_map from the count table as well, so empty
    # tiles also skip the x_l / adj DMA, not just the compute.
    @pl.when(cnt_ref[i, k] > 0)
    def _compute():
        mask = adj_ref[...] != 0                        # (TQ, TK); adj[i,j]==1 <=> edge j->i
        xl_bf = xl_ref[...]                             # (TK, HC) bf16, aggregation operand
        xr_s = xr_ref[...].astype(score_dtype)          # (TQ, HC)  W_r x_i (targets)
        xl_s = xl_bf.astype(score_dtype)                # (TK, HC)  W_l x_j (sources)
        att = att_ref[...].astype(score_dtype)          # (1, HC) flattened head-major

        # GATv2 scoring over the full head-concat slab: HC (=128 here) sits on
        # the 128-lane axis -> full lane occupancy for the dominant VALU work.
        e = xr_s[:, None, :] + xl_s[None, :, :]         # (TQ, TK, HC)
        e = jnp.where(e > 0, e, NEG_SLOPE * e)          # leaky_relu(., 0.2)
        ew = e * att[None, :, :]                        # (TQ, TK, HC)

        # TODO(synk): attention dropout (p=0.2) is a train-time op; eval semantics.
        for h in range(n_heads):
            cs = slice(h * channels, (h + 1) * channels)
            # per-head segment sum (f32 accumulation), then f32 online softmax
            s = jnp.sum(ew[:, :, cs].astype(jnp.float32), axis=-1)   # (TQ, TK)
            s = jnp.where(mask, s, MASK_NEG)

            m_prev = m_sc[h]                                          # (TQ, 1)
            m_new = jnp.maximum(m_prev, jnp.max(s, axis=1, keepdims=True))
            corr = jnp.exp(m_prev - m_new)
            p = jnp.where(mask, jnp.exp(s - m_new), 0.0)
            l_sc[h] = corr * l_sc[h] + jnp.sum(p, axis=1, keepdims=True)
            # p cast to bf16 for the MXU aggregation (standard flash practice).
            acc_sc[h] = corr * acc_sc[h] + jnp.dot(
                p.astype(jnp.bfloat16), xl_bf[:, cs],
                preferred_element_type=jnp.float32)
            m_sc[h] = m_new

    @pl.when(k == pl.num_programs(1) - 1)
    def _finalize():
        # guarded divide (self loops guarantee l > 0, but stay NaN-safe)
        total = acc_sc[0] / jnp.maximum(l_sc[0], 1e-30)
        for h in range(1, n_heads):
            total = total + acc_sc[h] / jnp.maximum(l_sc[h], 1e-30)
        y = total * inv_heads + bias_ref[...]           # head mean + GATv2Conv bias
        y = jnp.where(y > 0, y, NEG_SLOPE * y)          # F.leaky_relu(x, 0.2)
        y = y * scale_ref[...] + shift_ref[...]         # BatchNorm1d (eval, folded)
        if add_residual:
            y = y + res_ref[...].astype(jnp.float32)    # skip connection (layer 0)
        o_ref[...] = y.astype(o_ref.dtype)


def gat_layer_pallas(slab, att, adj, cnt, bias, scale, shift, res, *,
                     heads, channels, tq, tk, out_dtype):
    n = slab.shape[0]
    hc = heads * channels
    add_residual = res is not None
    kernel = functools.partial(
        _gat_layer_kernel, n_heads=heads, channels=channels,
        inv_heads=1.0 / heads, add_residual=add_residual,
        score_dtype=_score_dtype())

    in_specs = [
        pl.BlockSpec((tq, hc), lambda i, k, c: (i, 1)),           # x_r slab (target rows)
        pl.BlockSpec((tk, hc), lambda i, k, c: (k, 0)),           # x_l slab (source rows)
        # TODO(synk): make the x_l slab VMEM-resident (full-N block) when
        # N*HC*2 bytes is small, to avoid re-streaming it per q tile.
        pl.BlockSpec((1, hc), lambda i, k, c: (0, 0)),            # attention vectors (flat)
        pl.BlockSpec((tq, tk), lambda i, k, c: (i, k)),           # int8 edge-mask tile
        pl.BlockSpec((1, channels), lambda i, k, c: (0, 0)),      # conv bias
        pl.BlockSpec((1, channels), lambda i, k, c: (0, 0)),      # folded BN scale
        pl.BlockSpec((1, channels), lambda i, k, c: (0, 0)),      # folded BN shift
    ]
    args = [slab, slab, att, adj, bias, scale, shift]
    if add_residual:
        in_specs.append(pl.BlockSpec((tq, channels), lambda i, k, c: (i, 0)))
        args.append(res)

    grid_spec = pltpu.PrefetchScalarGridSpec(
        num_scalar_prefetch=1,
        grid=(n // tq, n // tk),
        in_specs=in_specs,
        out_specs=pl.BlockSpec((tq, channels), lambda i, k, c: (i, 0)),
        scratch_shapes=[
            pltpu.VMEM((heads, tq, 1), jnp.float32),          # running max
            pltpu.VMEM((heads, tq, 1), jnp.float32),          # running denom
            pltpu.VMEM((heads, tq, channels), jnp.float32),   # running accumulator
        ])

    return pl.pallas_call(
        kernel,
        out_shape=jax.ShapeDtypeStruct((n, channels), out_dtype),
        grid_spec=grid_spec,
        compiler_params=pltpu.CompilerParams(
            dimension_semantics=("parallel", "arbitrary"),
            vmem_limit_bytes=_vmem_limit_bytes()),
    )(cnt, *args)


# ------------------------- parameters / glue (JAX) --------------------------

def _glorot(key, shape):
    fan_in, fan_out = shape[-2], shape[-1]
    lim = (6.0 / (fan_in + fan_out)) ** 0.5
    return jax.random.uniform(key, shape, jnp.float32, -lim, lim)


def init_params(key, in_channels, hidden, heads, num_layers):
    params = {"layers": []}
    k_skip, key = jax.random.split(key)
    if in_channels == hidden:                                   # nn.Identity skip
        params["skip_w"] = jnp.eye(hidden, dtype=jnp.float32)
    else:                                                       # nn.Linear skip
        params["skip_w"] = _glorot(k_skip, (in_channels, hidden))
    params["skip_b"] = jnp.zeros((hidden,), jnp.float32)
    din = in_channels
    for _ in range(num_layers):
        key, kl, kr, ka = jax.random.split(key, 4)
        params["layers"].append({
            "w_l": _glorot(kl, (din, heads * hidden)),
            "b_l": jnp.zeros((heads * hidden,), jnp.float32),
            "w_r": _glorot(kr, (din, heads * hidden)),
            "b_r": jnp.zeros((heads * hidden,), jnp.float32),
            "att": _glorot(ka, (heads, hidden)),
            "bias": jnp.zeros((hidden,), jnp.float32),          # GATv2Conv bias
            "bn_gamma": jnp.ones((hidden,), jnp.float32),
            "bn_beta": jnp.zeros((hidden,), jnp.float32),
            "bn_mean": jnp.zeros((hidden,), jnp.float32),       # running stats
            "bn_var": jnp.ones((hidden,), jnp.float32),
        })
        din = hidden
    return params


def fuse_params(params, *, hidden):
    """Concatenate W_l | W_r (| skip for layer 0) into one bf16 weight per layer
    and fold eval-mode BatchNorm into a scale/shift."""
    # TODO(synk): training-mode BatchNorm (batch statistics) is not folded here;
    # eval-mode running stats are used.
    fused = []
    for i, p in enumerate(params["layers"]):
        ws = [p["w_l"], p["w_r"]]
        bs = [p["b_l"], p["b_r"]]
        if i == 0:
            ws.append(params["skip_w"])
            bs.append(params["skip_b"])
        scale = p["bn_gamma"] / jnp.sqrt(p["bn_var"] + BN_EPS)
        shift = p["bn_beta"] - p["bn_mean"] * scale
        fused.append({
            "w": jnp.concatenate(ws, axis=1).astype(jnp.bfloat16),
            "b": jnp.concatenate(bs, axis=0),
            "att": p["att"].reshape(1, -1),          # head-major flattened (1, H*C)
            "bias": p["bias"].reshape(1, hidden),
            "scale": scale.reshape(1, hidden),
            "shift": shift.reshape(1, hidden),
        })
    return fused


def build_adjacency(edge_index, num_nodes):
    # valid-edge filtering (edge_index[k] < num_nodes) + GATv2's
    # remove_self_loops/add_self_loops, expressed as a dense int8 mask.
    # Forcing the diagonal also covers the "no valid edges -> self loop" branch.
    src, dst = edge_index[0], edge_index[1]
    valid = (src < num_nodes) & (dst < num_nodes)
    src_c = jnp.where(valid, src, 0)
    dst_c = jnp.where(valid, dst, 0)
    adj = jnp.zeros((num_nodes, num_nodes), jnp.int32)
    adj = adj.at[dst_c, src_c].max(valid.astype(jnp.int32))
    idx = jnp.arange(num_nodes)
    adj = adj.at[idx, idx].set(1)
    return adj.astype(jnp.int8)


def encoder_forward(params, x, edge_index, *, heads, hidden, num_layers):
    n = x.shape[0]
    hc = heads * hidden
    layers = fuse_params(params, hidden=hidden)
    adj = build_adjacency(edge_index, n)
    tq, tk = _tile_sizes(n)
    # per-(q-tile, k-tile) edge counts for sparse tile skipping (SMEM prefetch)
    cnt = (adj.astype(jnp.int32)
              .reshape(n // tq, tq, n // tk, tk).sum(axis=(1, 3)))

    for i in range(num_layers):
        layer = layers[i]
        # (N, 2*H*C [+C]) lane-dense slab [W_l x | W_r x (| skip x)];
        # heads are column slices, so no JAX-level head transpose is needed.
        y = fused_proj_pallas(x, layer["w"], layer["b"], tq=tq)
        res = y[:, 2 * hc:] if i == 0 else None       # h = skip(x)
        out_dtype = jnp.float32 if i == num_layers - 1 else jnp.bfloat16
        x = gat_layer_pallas(y, layer["att"], adj, cnt, layer["bias"],
                             layer["scale"], layer["shift"], res,
                             heads=heads, channels=hidden, tq=tq, tk=tk,
                             out_dtype=out_dtype)
    return x


if __name__ == "__main__":
    N, IN_CH, HIDDEN, HEADS, NUM_LAYERS = 16, 8, 32, 4, 2
    key = jax.random.PRNGKey(0)
    k_x, k_src, k_dst, k_params = jax.random.split(key, 4)

    x = jax.random.normal(k_x, (N, IN_CH), dtype=jnp.float32)
    num_edges = 40
    # endpoints drawn from [0, N+3) so a few edges exercise the validity mask
    src = jax.random.randint(k_src, (num_edges,), 0, N + 3, dtype=jnp.int32)
    dst = jax.random.randint(k_dst, (num_edges,), 0, N + 3, dtype=jnp.int32)
    edge_index = jnp.stack([src, dst], axis=0)

    params = init_params(k_params, IN_CH, HIDDEN, HEADS, NUM_LAYERS)

    out = encoder_forward(params, x, edge_index,
                          heads=HEADS, hidden=HIDDEN, num_layers=NUM_LAYERS)
    out = jax.block_until_ready(out)
    assert out.shape == (N, HIDDEN), out.shape
    assert bool(jnp.all(jnp.isfinite(out)))
    print("KERNEL_OK")
</pallas_src>

<mosaic_0001>
module attributes {stable_mosaic.version = 11 : i64} {
  func.func @_fused_proj_kernel(%arg0: i32, %arg1: memref<16x8xf32, #tpu.memory_space<vmem>>, %arg2: memref<8x288xbf16, #tpu.memory_space<vmem>>, %arg3: memref<1x288xf32, #tpu.memory_space<vmem>>, %arg4: memref<16x288xbf16, #tpu.memory_space<vmem>>) attributes {dimension_semantics = [#tpu.dimension_semantics<parallel>], iteration_bounds = array<i64: 1>, scalar_prefetch = 0 : i64, scratch_operands = 0 : i64, tpu.core_type = #tpu.core_type<tc>, window_params = [{transform_indices = @transform_0, window_bounds = array<i64: 16, 8>}, {pipeline_mode = #tpu.pipeline_mode<synchronous>, transform_indices = @transform_1, window_bounds = array<i64: 8, 288>}, {pipeline_mode = #tpu.pipeline_mode<synchronous>, transform_indices = @transform_2, window_bounds = array<i64: 1, 288>}, {transform_indices = @transform_3, window_bounds = array<i64: 16, 288>}]} {
    %c0 = arith.constant 0 : index
    %c0_0 = arith.constant 0 : index
    %0 = vector.load %arg1[%c0, %c0_0] : memref<16x8xf32, #tpu.memory_space<vmem>>, vector<16x8xf32>
    %1 = arith.truncf %0 : vector<16x8xf32> to vector<16x8xbf16>
    %c0_1 = arith.constant 0 : index
    %c0_2 = arith.constant 0 : index
    %2 = vector.load %arg2[%c0_1, %c0_2] : memref<8x288xbf16, #tpu.memory_space<vmem>>, vector<8x288xbf16>
    %cst = arith.constant dense<0.000000e+00> : vector<16x288xf32>
    %3 = tpu.matmul %1, %2, %cst {dimension_numbers = #tpu.dot_dimension_numbers<[1], [0], [0], [1], [0, 0, 1, 1], [], []>} : vector<16x8xbf16>, vector<8x288xbf16>, vector<16x288xf32> -> vector<16x288xf32>
    %c0_3 = arith.constant 0 : index
    %c0_4 = arith.constant 0 : index
    %4 = vector.load %arg3[%c0_3, %c0_4] : memref<1x288xf32, #tpu.memory_space<vmem>>, vector<1x288xf32>
    %5 = vector.broadcast %4 : vector<1x288xf32> to vector<16x288xf32>
    %6 = arith.addf %3, %5 : vector<16x288xf32>
    %7 = arith.truncf %6 : vector<16x288xf32> to vector<16x288xbf16>
    %c0_5 = arith.constant 0 : index
    %c0_6 = arith.constant 0 : index
    %8 = vector.load %arg4[%c0_5, %c0_6] : memref<16x288xbf16, #tpu.memory_space<vmem>>, vector<16x288xbf16>
    tpu.vector_store %arg4[%c0_5, %c0_6], %7 {strides = array<i32>} : memref<16x288xbf16, #tpu.memory_space<vmem>>, vector<16x288xbf16>,
    return
  }
  func.func @transform_0(%arg0: i32) -> (i32, i32) {
    %c0_i32 = arith.constant 0 : i32
    %c0_i32_0 = arith.constant 0 : i32
    return %arg0, %c0_i32 : i32, i32
  }
  func.func @transform_1(%arg0: i32) -> (i32, i32) {
    %c0_i32 = arith.constant 0 : i32
    %c0_i32_0 = arith.constant 0 : i32
    %c0_i32_1 = arith.constant 0 : i32
    return %c0_i32, %c0_i32_0 : i32, i32
  }
  func.func @transform_2(%arg0: i32) -> (i32, i32) {
    %c0_i32 = arith.constant 0 : i32
    %c0_i32_0 = arith.constant 0 : i32
    %c0_i32_1 = arith.constant 0 : i32
    return %c0_i32, %c0_i32_0 : i32, i32
  }
  func.func @transform_3(%arg0: i32) -> (i32, i32) {
    %c0_i32 = arith.constant 0 : i32
    %c0_i32_0 = arith.constant 0 : i32
    return %arg0, %c0_i32 : i32, i32
  }
}

</mosaic_0001>

<llo_original>
// kernel: tpu_custom_call.1
$region0: #{tpu_custom_call.1}
  #allocation0 [shape = 'u32[]', space=smem, size = 0x4, offset = 0x4, fixed_abs, tag = 'smem constant byte address 0x4 - core index']
  #allocation1 [shape = 'u32[72,128]{1,0:T(1,128)}', space=vmem, size = 0x9000, scoped, tag = 'internal scratch']
  %s0 = inlined_call_operand.vmem [shape: f32[16,8], index: 0, kind: input, shape index: {}]
  %s1 = inlined_call_operand.vmem [shape: bf16[8,288], index: 1, kind: input, shape index: {}]
  %s2 = inlined_call_operand.vmem [shape: f32[1,288], index: 2, kind: input, shape index: {}]
  %s3 = inlined_call_operand.hbm [shape: bf16[16,288], index: 3, kind: output, shape index: {}]
  %s4 = sld [smem:[#allocation0]]
  $region22: #{tpu_custom_call.1} parent=0
    _
  %s6 = ssub.s32 1, %s4
  %s7 = scalar_select 0, %s6, %s4
  $region1: #{tpu_custom_call.1} parent=0
    #allocation2 [shape = 'u8[12288]{0}', space=vmem, size = 0x3000, scoped, tag = 'output window, operand 0, single buffered']
    #allocation3 [shape = 's32[1]{0}', space=sflag, size = 0x4, scoped, tag = 'scoped memory for tpu_custom_call.1']
    %8 = vsyncpa [#allocation3], 0
    // Predicated region
    $region2: #{tpu_custom_call.1} parent=1 // pred_check
      _
    $region3: #{tpu_custom_call.1} parent=1 // pred_check_branch
      %10 = sbr.rel (0) target = $region5
    $region4: #{tpu_custom_call.1} parent=1 // pred_region
      _
    $region5: #{tpu_custom_call.1} parent=1 // pred_fallthru
      _
    // Predicated region
    $region6: #{tpu_custom_call.1} parent=1 // pred_check
      _
    $region7: #{tpu_custom_call.1} parent=1 // pred_check_branch
      %12 = sbr.rel (0) target = $region9
    $region8: #{tpu_custom_call.1} parent=1 // pred_region
      _
    $region9: #{tpu_custom_call.1} parent=1 // pred_fallthru
      _
    // Predicated region
    $region10: #{tpu_custom_call.1} parent=1 // pred_check
      _
    $region11: #{tpu_custom_call.1} parent=1 // pred_check_branch
      %14 = sbr.rel (0) target = $region13
    $region12: #{tpu_custom_call.1} parent=1 // pred_region
      _
    $region13: #{tpu_custom_call.1} parent=1 // pred_fallthru
      _
    %v16 = vld [vmem:[%s0] sm:$0xff]
    %v17 = vld [vmem:[%s0 + $0x8] sm:$0xff]
    %v18 = vpack.c.bf16 %v17, %v16
    %v19 = vld [vmem:[%s1] sm:$0xff]
    %v20 = vld [vmem:[%s1 + $0x8] sm:$0xf]
    %v21 = vld [vmem:[%s2] sm:$0x7]
    %v23 = vperm.slane %v21, 0
    %v24 = vperm.slane %v21, 1
    %v25 = vperm.slane %v21, 2
    %v31 = vunpack.c.l.b16 %v19
    %v32 = vunpack.c.h.b16 %v19
    %v33 = vunpack.c.l.b16 %v20
    %v34 = vpack.c.b16 %v31, %v31
    %v35 = vpack.c.b16 %v32, %v32
    %v36 = vpack.c.b16 %v33, %v33
    %vm37 = vcmask 64512
    %v39 = vsel %vm37, %v18, 0
    %vm41 = vcmask 1043456
    %v43 = vsel %vm41, %v34, 0
    %v46 = vsel %vm41, %v35, 0
    %v49 = vsel %vm41, %v36, 0
    %51 = vmatpush.bf16.msra.mxu0 0
    %52 = vmatpush.bf16.msra.mxu0 0
    %53 = vmatpush.bf16.msra.mxu0 0
    %54 = vmatpush.bf16.msra.mxu0 0
    %55 = vmatpush.bf16.msra.mxu0 0
    %56 = vmatpush.bf16.msra.mxu0 0
    %57 = vmatpush.bf16.msra.mxu0 0
    %58 = vmatpush.bf16.msra.mxu0 %v43
    %59 = vmatmul.bf16.gmra.mxu0 %v39
    %v60 = vpop.f32.mrf.mxu0
    %v61 = vadd.f32 %v23, %v60
    %v62 = vpop.f32.mrf.mxu0
    %v63 = vadd.f32 %v23, %v62
    %64 = vdwg.mxu0
    %65 = vmatpush.bf16.msra.mxu0 0
    %66 = vmatpush.bf16.msra.mxu0 0
    %67 = vmatpush.bf16.msra.mxu0 0
    %68 = vmatpush.bf16.msra.mxu0 0
    %69 = vmatpush.bf16.msra.mxu0 0
    %70 = vmatpush.bf16.msra.mxu0 0
    %71 = vmatpush.bf16.msra.mxu0 0
    %72 = vmatpush.bf16.msra.mxu0 %v46
    %73 = vmatmul.bf16.gmra.mxu0 %v39
    %v74 = vpop.f32.mrf.mxu0
    %v75 = vadd.f32 %v24, %v74
    %v76 = vpop.f32.mrf.mxu0
    %v77 = vadd.f32 %v24, %v76
    %78 = vdwg.mxu0
    %79 = vmatpush.bf16.msra.mxu0 0
    %80 = vmatpush.bf16.msra.mxu0 0
    %81 = vmatpush.bf16.msra.mxu0 0
    %82 = vmatpush.bf16.msra.mxu0 0
    %83 = vmatpush.bf16.msra.mxu0 0
    %84 = vmatpush.bf16.msra.mxu0 0
    %85 = vmatpush.bf16.msra.mxu0 0
    %86 = vmatpush.bf16.msra.mxu0 %v49
    %87 = vmatmul.bf16.gmra.mxu0 %v39
    %v88 = vpop.f32.mrf.mxu0
    %v89 = vadd.f32 %v25, %v88
    %v90 = vpop.f32.mrf.mxu0
    %v91 = vadd.f32 %v25, %v90
    %92 = vdwg.mxu0
    %v93 = vpack.c.bf16 %v75, %v61
    %v94 = vpack.c.bf16 %v89, %v89
    %v95 = vpack.c.bf16 %v77, %v63
    %v96 = vpack.c.bf16 %v91, %v91
    %97 = vst [vmem:[#allocation2] sm:$0xff] %v93
    %vm98 = vcmask 257024
    %99 = vst.msk [vmem:[#allocation2 + $0x8] sm:$0xf] %vm98, %v94
    %100 = vst [vmem:[#allocation2 + $0xc] sm:$0xff] %v95
    %101 = vst.msk [vmem:[#allocation2 + $0x14] sm:$0xf] %vm98, %v96
    // Predicated region
    $region14: #{tpu_custom_call.1} parent=1 // pred_check
      _
    $region15: #{tpu_custom_call.1} parent=1 // pred_check_branch
      %103 = sbr.rel (0) target = $region17
    $region16: #{tpu_custom_call.1} parent=1 // pred_region
      %105 = vsyncadd [#allocation3], 0
      %s106 = sshll.u32 [#allocation2], 4
      %s107 = int_to_ptr.vmem [resolvable:$true] %s106
      %s108 = sshll.u32 %s3, 4
      %s109 = int_to_ptr.hbm [resolvable:$true] %s108
      %114 = dma.vmem_to_hbm [thread:$0]  %s107, 384, %s109, [#allocation3], 192, 192, 12
    $region17: #{tpu_custom_call.1} parent=1 // pred_fallthru
      _
    // Predicated region
    $region18: #{tpu_custom_call.1} parent=1 // pred_check
      _
    $region19: #{tpu_custom_call.1} parent=1 // pred_check_branch
      %116 = sbr.rel (0) target = $region21
    $region20: #{tpu_custom_call.1} parent=1 // pred_region
      %118 = dma.done [#allocation3], 384
    $region21: #{tpu_custom_call.1} parent=1 // pred_fallthru
      _
    %119 = vsyncpa [#allocation3], 1

</llo_original>
